<compile_context>
chip_gen: v6e
topology: v6e:2x2x1
jax: 0.10.0
libtpu: 0.0.40
codegen_flags: <defaults>
</compile_context>

<pallas_src>
import math
from functools import partial

import jax
import jax.numpy as jnp
from jax.experimental import pallas as pl
from jax.experimental.pallas import tpu as pltpu

_LANES = 128  # TPU vreg lane width


def _pos_embed_kernel(div_ref, bias_ref, o_ref, *, pos_per_tile: int):
    """One grid step writes a (tile_rows, 128) lane-dense slab of the table.

    div_ref[r, l]  = exp(-2k * ln(7500)/d_model)                  (k = col // 2)
    bias_ref[r, l] = local_pos * div_term + (col & 1) * pi/2
    Only the scalar base position depends on the grid index, so the per-element
    hot path is: one mul + one add (VPU) + one sin (EUP) + one full-lane store.
    """
    i = pl.program_id(0)
    base_pos = (i * pos_per_tile).astype(jnp.float32)
    o_ref[...] = jnp.sin(base_pos * div_ref[...] + bias_ref[...])


def position_embedding(x: jax.Array, d_model: int, max_len: int = 5000) -> jax.Array:
    """Equivalent of PositionEmbedding(d_model, max_len).forward(x).

    x: array of shape (batch, seq_len); only seq_len is used.
    returns: float32 array of shape (seq_len, d_model).
    """
    _, seq_len = x.shape
    assert seq_len <= max_len
    assert d_model % 2 == 0, "PyTorch reference requires even d_model"

    total = seq_len * d_model
    rows = pl.cdiv(total, _LANES)  # flat slab rows of 128 lanes

    # tile_rows must be a multiple of:
    #   * 8                              (sublane tiling constraint)
    #   * d_model / gcd(d_model, 128)    (each tile covers a whole number of
    #                                     positions -> the per-tile column
    #                                     pattern is identical for every step)
    period = d_model // math.gcd(d_model, _LANES)
    unit = math.lcm(8, period)

    target_rows = 512  # ~256 KiB per f32 buffer -> ~1.5 MiB total VMEM
    tile_rows = max(unit, (target_rows // unit) * unit)
    rows_padded = pl.cdiv(rows, unit) * unit
    tile_rows = min(tile_rows, rows_padded)
    padded_rows = pl.cdiv(rows_padded, tile_rows) * tile_rows
    grid = (padded_rows // tile_rows,)
    pos_per_tile = (tile_rows * _LANES) // d_model

    # Grid-invariant per-tile pattern (tiny: tile_rows x 128), computed once.
    # flat index within a tile: lf = r*128 + lane ; col = lf % d_model,
    # local position = lf // d_model (base position is added in-kernel).
    lf = (jnp.arange(tile_rows, dtype=jnp.int32)[:, None] * _LANES
          + jnp.arange(_LANES, dtype=jnp.int32)[None, :])
    col = lf % d_model
    local_pos = (lf // d_model).astype(jnp.float32)
    two_k = (col - (col % 2)).astype(jnp.float32)
    div_term = jnp.exp(two_k * jnp.float32(-(math.log(7500.0) / d_model)))
    phase = (col % 2).astype(jnp.float32) * jnp.float32(math.pi / 2.0)
    bias = local_pos * div_term + phase

    kernel = partial(_pos_embed_kernel, pos_per_tile=pos_per_tile)

    flat = pl.pallas_call(
        kernel,
        out_shape=jax.ShapeDtypeStruct((padded_rows, _LANES), jnp.float32),
        grid_spec=pltpu.PrefetchScalarGridSpec(
            num_scalar_prefetch=0,
            grid=grid,
            in_specs=[
                # Constant index_map -> fetched into VMEM once, reused by every step.
                pl.BlockSpec((tile_rows, _LANES), lambda i: (0, 0)),
                pl.BlockSpec((tile_rows, _LANES), lambda i: (0, 0)),
            ],
            out_specs=pl.BlockSpec((tile_rows, _LANES), lambda i: (i, 0)),
        ),
        compiler_params=pltpu.CompilerParams(
            dimension_semantics=("parallel",),
        ),
    )(div_term, bias)

    # Drop tail padding and restore the logical (seq_len, d_model) view.
    return flat.reshape(-1)[:total].reshape(seq_len, d_model)


def _reference(seq_len: int, d_model: int) -> jnp.ndarray:
    pos = jnp.arange(seq_len, dtype=jnp.float32)[:, None]
    div = jnp.exp(jnp.arange(0, d_model, 2, dtype=jnp.float32)
                  * (-(math.log(7500.0) / d_model)))
    emb = jnp.zeros((seq_len, d_model), jnp.float32)
    emb = emb.at[:, 0::2].set(jnp.sin(pos * div))
    emb = emb.at[:, 1::2].set(jnp.cos(pos * div))
    return emb


if __name__ == "__main__":
    d_model = 32
    batch, seq_len = 2, 8

    key = jax.random.PRNGKey(0)
    # x plays the role of token ids; only its shape matters to forward().
    x = jax.random.randint(key, (batch, seq_len), 0, 100, dtype=jnp.int32)

    out = position_embedding(x, d_model=d_model, max_len=5000)
    out = jax.block_until_ready(out)

    ref = _reference(seq_len, d_model)
    assert out.shape == (seq_len, d_model)
    assert out.dtype == jnp.float32
    assert jnp.allclose(out, ref, atol=1e-5, rtol=1e-5), \
        float(jnp.max(jnp.abs(out - ref)))

    print("KERNEL_OK")
</pallas_src>

<mosaic_0001>
module attributes {stable_mosaic.version = 11 : i64} {
  func.func @_pos_embed_kernel(%arg0: i32, %arg1: memref<8x128xf32, #tpu.memory_space<vmem>>, %arg2: memref<8x128xf32, #tpu.memory_space<vmem>>, %arg3: memref<8x128xf32, #tpu.memory_space<vmem>>) attributes {dimension_semantics = [#tpu.dimension_semantics<parallel>], iteration_bounds = array<i64: 1>, scalar_prefetch = 0 : i64, scratch_operands = 0 : i64, tpu.core_type = #tpu.core_type<tc>, window_params = [{pipeline_mode = #tpu.pipeline_mode<synchronous>, transform_indices = @transform_0, window_bounds = array<i64: 8, 128>}, {pipeline_mode = #tpu.pipeline_mode<synchronous>, transform_indices = @transform_1, window_bounds = array<i64: 8, 128>}, {transform_indices = @transform_2, window_bounds = array<i64: 8, 128>}]} {
    %c32_i32 = arith.constant 32 : i32
    %0 = arith.muli %arg0, %c32_i32 : i32
    %1 = arith.sitofp %0 : i32 to f32
    %c0 = arith.constant 0 : index
    %c0_0 = arith.constant 0 : index
    %2 = vector.load %arg1[%c0, %c0_0] : memref<8x128xf32, #tpu.memory_space<vmem>>, vector<8x128xf32>
    %3 = vector.broadcast %1 : f32 to vector<8x128xf32>
    %4 = arith.mulf %3, %2 : vector<8x128xf32>
    %c0_1 = arith.constant 0 : index
    %c0_2 = arith.constant 0 : index
    %5 = vector.load %arg2[%c0_1, %c0_2] : memref<8x128xf32, #tpu.memory_space<vmem>>, vector<8x128xf32>
    %6 = arith.addf %4, %5 : vector<8x128xf32>
    %7 = math.sin %6 : vector<8x128xf32>
    %c0_3 = arith.constant 0 : index
    %c0_4 = arith.constant 0 : index
    %8 = vector.load %arg3[%c0_3, %c0_4] : memref<8x128xf32, #tpu.memory_space<vmem>>, vector<8x128xf32>
    tpu.vector_store %arg3[%c0_3, %c0_4], %7 {strides = array<i32>} : memref<8x128xf32, #tpu.memory_space<vmem>>, vector<8x128xf32>,
    return
  }
  func.func @transform_0(%arg0: i32) -> (i32, i32) {
    %c0_i32 = arith.constant 0 : i32
    %c0_i32_0 = arith.constant 0 : i32
    %c0_i32_1 = arith.constant 0 : i32
    return %c0_i32, %c0_i32_0 : i32, i32
  }
  func.func @transform_1(%arg0: i32) -> (i32, i32) {
    %c0_i32 = arith.constant 0 : i32
    %c0_i32_0 = arith.constant 0 : i32
    %c0_i32_1 = arith.constant 0 : i32
    return %c0_i32, %c0_i32_0 : i32, i32
  }
  func.func @transform_2(%arg0: i32) -> (i32, i32) {
    %c0_i32 = arith.constant 0 : i32
    %c0_i32_0 = arith.constant 0 : i32
    return %arg0, %c0_i32 : i32, i32
  }
}

</mosaic_0001>

<llo_original>
// kernel: tpu_custom_call.1
$region0: #{tpu_custom_call.1}
  #allocation0 [shape = 'u32[]', space=smem, size = 0x4, offset = 0x4, fixed_abs, tag = 'smem constant byte address 0x4 - core index']
  #allocation1 [shape = 'u32[144,128]{1,0:T(1,128)}', space=vmem, size = 0x12000, scoped, tag = 'internal scratch']
  %s0 = inlined_call_operand.hbm [shape: f32[8,128], index: 0, kind: input, shape index: {}]
  %s1 = inlined_call_operand.hbm [shape: f32[8,128], index: 1, kind: input, shape index: {}]
  %s2 = inlined_call_operand.hbm [shape: f32[8,128], index: 2, kind: output, shape index: {}]
  %s3 = sld [smem:[#allocation0]]
  $region26: #{tpu_custom_call.1} parent=0
    _
  %s5 = ssub.s32 1, %s3
  %s6 = scalar_select 0, %s5, %s3
  $region1: #{tpu_custom_call.1} parent=0
    #allocation2 [shape = 'u8[4096]{0}', space=vmem, size = 0x1000, scoped, tag = 'input window, operand 0, single buffered']
    #allocation3 [shape = 's32[1]{0}', space=sflag, size = 0x4, scoped, tag = 'scoped memory for tpu_custom_call.1']
    #allocation4 [shape = 's32[1]{0}', space=sflag, size = 0x4, scoped, tag = 'scoped memory for tpu_custom_call.1']
    #allocation5 [shape = 'u8[4096]{0}', space=vmem, size = 0x1000, scoped, tag = 'input window, operand 1, single buffered']
    #allocation6 [shape = 's32[1]{0}', space=sflag, size = 0x4, scoped, tag = 'scoped memory for tpu_custom_call.1']
    #allocation7 [shape = 'u8[4096]{0}', space=vmem, size = 0x1000, scoped, tag = 'output window, operand 0, single buffered']
    %7 = vsyncpa [#allocation3], 0
    %8 = vsyncpa [#allocation6], 0
    %9 = vsyncpa [#allocation4], 0
    // Predicated region
    $region2: #{tpu_custom_call.1} parent=1 // pred_check
      _
    $region3: #{tpu_custom_call.1} parent=1 // pred_check_branch
      %11 = sbr.rel (0) target = $region5
    $region4: #{tpu_custom_call.1} parent=1 // pred_region
      %s13 = ssub.s32 128, 128
      %14 = vsyncadd [#allocation3], %s13
      %s16 = sshll.u32 [#allocation2], 4
      %s17 = int_to_ptr.vmem [resolvable:$true] %s16
      %19 = dma.hbm_to_vmem [thread:$0]  %s0, 128, %s17, [#allocation3]
    $region5: #{tpu_custom_call.1} parent=1 // pred_fallthru
      _
    // Predicated region
    $region6: #{tpu_custom_call.1} parent=1 // pred_check
      _
    $region7: #{tpu_custom_call.1} parent=1 // pred_check_branch
      %21 = sbr.rel (0) target = $region9
    $region8: #{tpu_custom_call.1} parent=1 // pred_region
      %s23 = ssub.s32 128, 128
      %24 = vsyncadd [#allocation6], %s23
      %s26 = sshll.u32 [#allocation5], 4
      %s27 = int_to_ptr.vmem [resolvable:$true] %s26
      %29 = dma.hbm_to_vmem [thread:$0]  %s1, 128, %s27, [#allocation6]
    $region9: #{tpu_custom_call.1} parent=1 // pred_fallthru
      _
    // Predicated region
    $region10: #{tpu_custom_call.1} parent=1 // pred_check
      _
    $region11: #{tpu_custom_call.1} parent=1 // pred_check_branch
      %31 = sbr.rel (0) target = $region13
    $region12: #{tpu_custom_call.1} parent=1 // pred_region
      %32 = dma.done [#allocation3], 128
    $region13: #{tpu_custom_call.1} parent=1 // pred_fallthru
      _
    // Predicated region
    $region14: #{tpu_custom_call.1} parent=1 // pred_check
      _
    $region15: #{tpu_custom_call.1} parent=1 // pred_check_branch
      %34 = sbr.rel (0) target = $region17
    $region16: #{tpu_custom_call.1} parent=1 // pred_region
      %35 = dma.done [#allocation6], 128
    $region17: #{tpu_custom_call.1} parent=1 // pred_fallthru
      _
    %s36 = smul.u32 0, 32
    %s37 = scvt.s32.f32 %s36
    %v38 = vld [vmem:[#allocation2] sm:$0xff]
    %v39 = vstv %s37
    %v40 = vmul.f32 %v39, %v38
    %v41 = vld [vmem:[#allocation5] sm:$0xff]
    %v42 = vadd.f32 %v40, %v41
    %v43 = vand.u32 2147483647, %v42
    %vm44 = vcmp.le.f32.partialorder %v43, 0.7853982
    %vm45 = vcmp.lt.s32.totalorder %v42, 0
    %v46 = vand.u32 %v42, 2139095040
    %v47 = vshrl.u32 %v46, 23
    %v48 = vsub.s32 %v47, 127
    %v49 = vand.u32 2147483647, %v42
    %v50 = vand.u32 %v49, 8388607
    %v51 = vor.u32 %v50, 8388608
    %v52 = vsub.s32 0, %v51
    %v53 = vadd.s32 %v48, 1
    %vm54 = vcmp.gt.s32.totalorder %v53, 0
    %v55 = vsel %vm54, %v53, 0
    %v56 = vshrl.u32 %v55, 5
    %v57 = vand.u32 %v55, 31
    %v58 = vsub.s32 32, %v57
    %v59 = vshrl.u32 683565275, %v58
    %v60 = vshll.u32 683565275, %v57
    %v61 = vshrl.u32 2475754826, %v58
    %v62 = vor.u32 %v60, %v61
    %v63 = vshll.u32 2475754826, %v57
    %v64 = vshrl.u32 2131351028, %v58
    %v65 = vor.u32 %v63, %v64
    %v66 = vshll.u32 2131351028, %v57
    %v67 = vshrl.u32 2102212464, %v58
    %v68 = vor.u32 %v66, %v67
    %v69 = vshll.u32 2102212464, %v57
    %v70 = vshrl.u32 920167782, %v58
    %v71 = vor.u32 %v69, %v70
    %v72 = vshll.u32 920167782, %v57
    %v73 = vshrl.u32 1326507024, %v58
    %v74 = vor.u32 %v72, %v73
    %vm75 = vcmp.lt.s32.totalorder %v56, 1
    %vm76 = vcmp.lt.s32.totalorder %v56, 2
    %vm77 = vcmp.lt.s32.totalorder %v56, 3
    %vm78 = vcmp.lt.s32.totalorder %v56, 4
    %v79 = vsel %vm75, %v59, %v62
    %v80 = vsel %vm78, %v68, 2102212464
    %v81 = vsel %vm77, %v65, %v80
    %v82 = vsel %vm76, %v79, %v81
    %v83 = vsel %vm75, %v62, %v65
    %v84 = vsel %vm78, %v71, 920167782
    %v85 = vsel %vm77, %v68, %v84
    %v86 = vsel %vm76, %v83, %v85
    %v87 = vsel %vm75, %v65, %v68
    %v88 = vsel %vm78, %v74, 1326507024
    %v89 = vsel %vm77, %v71, %v88
    %v90 = vsel %vm76, %v87, %v89
    %v91 = vshll.u32 %v51, 8
    %v92 = vmul.u32.u64.compose %v91, %v90
    %v93 = vextract.low.u32 %v92
    %v94 = vextract.high.u32 %v92
    %v95 = vmul.u32.u64.compose %v91, %v86
    %v96 = vextract.low.u32 %v95
    %v97 = vextract.high.u32 %v95
    %v98 = vmul.u32 %v91, %v82
    %v99 = vadd.s32 %v94, %v96
    %vm100 = vc.u32 %v94, %v96
    %v101 = vadd.s32 %v97, 1
    %v102 = vsel %vm100, %v101, %v97
    %v103 = vadd.s32 %v98, %v102
    %v104 = vadd.s32 %v103, 536870912
    %v105 = vshrl.u32 %v104, 30
    %v106 = vshll.u32 %v105, 30
    %v107 = vsub.s32 %v103, %v106
    %vm108 = vcmp.lt.s32.totalorder %v107, 0
    %v109 = vsub.s32 0, %v107
    %v110 = vsel %vm108, %v109, %v107
    %v111 = vclz %v110
    %v112 = vsub.s32 %v111, 2
    %vm113 = vcmp.gt.s32.totalorder 0, %v112
    %v114 = vsel %vm113, 0, %v112
    %v115 = vsub.s32 32, %v114
    %v116 = vshll.u32 %v107, %v114
    %v117 = vshrl.u32 %v99, %v115
    %v118 = vor.u32 %v116, %v117
    %v119 = vsub.s32 4294967266, %v114
    %v120 = vadd.s32 %v119, 127
    %v121 = vshll.u32 %v120, 23
    %v122 = vor.u32 4788187, %v121
    %v123 = vand.u32 2147483647, %v122
    %v125 = vcvt.s32.f32 %v118
    %v126 = vmul.f32 %v125, %v123
    %v127 = vxor.u32 %v126, 2147483648
    %v128 = vsel %vm45, %v127, %v126
    %v129 = vsub.s32 4, %v105
    %v130 = vsel %vm45, %v129, %v105
    %v131 = vsel %vm44, %v42, %v128
    %v132 = vsel %vm44, 0, %v130
    %v133 = vcosq.f32.pop %v131
    %v134 = vsinq.f32.pop %v131
    %vm135 = vweird.f32 %v42
    %v136 = vadd.s32 %v132, 3
    %v137 = vand.u32 %v136, 3
    %vm138 = vcmp.lt.s32.totalorder %v137, 2
    %vm139 = vcmp.eq.s32.totalorder %v137, 0
    %v140 = vxor.u32 %v134, 2147483648
    %v141 = vsel %vm139, %v133, %v140
    %vm142 = vcmp.eq.s32.totalorder %v137, 2
    %v143 = vxor.u32 %v133, 2147483648
    %v144 = vsel %vm142, %v143, %v134
    %v145 = vsel %vm138, %v141, %v144
    %v146 = vsel %vm135, nan, %v145
    %147 = vst [vmem:[#allocation7] sm:$0xff] %v146
    // Predicated region
    $region18: #{tpu_custom_call.1} parent=1 // pred_check
      _
    $region19: #{tpu_custom_call.1} parent=1 // pred_check_branch
      %149 = sbr.rel (0) target = $region21
    $region20: #{tpu_custom_call.1} parent=1 // pred_region
      %s151 = ssub.s32 128, 128
      %152 = vsyncadd [#allocation4], %s151
      %s154 = sshll.u32 [#allocation7], 4
      %s155 = int_to_ptr.vmem [resolvable:$true] %s154
      %157 = dma.vmem_to_hbm [thread:$0]  %s155, 128, %s2, [#allocation4]
    $region21: #{tpu_custom_call.1} parent=1 // pred_fallthru
      _
    // Predicated region
    $region22: #{tpu_custom_call.1} parent=1 // pred_check
      _
    $region23: #{tpu_custom_call.1} parent=1 // pred_check_branch
      %159 = sbr.rel (0) target = $region25
    $region24: #{tpu_custom_call.1} parent=1 // pred_region
      %160 = dma.done [#allocation4], 128
    $region25: #{tpu_custom_call.1} parent=1 // pred_fallthru
      _
    %161 = vsyncpa [#allocation3], 1
    %162 = vsyncpa [#allocation6], 1
    %163 = vsyncpa [#allocation4], 1

</llo_original>
